<compile_context>
chip_gen: v5e
topology: v5e:2x2
jax: 0.10.0
libtpu: 0.0.40
codegen_flags: <defaults>
</compile_context>

<pallas_src>
import math

import jax
import jax.numpy as jnp
from jax import lax
from jax.experimental import pallas as pl
from jax.experimental.pallas import tpu as pltpu

LN_EPS = 1e-5


# ---------------------------------------------------------------------------
# Fused kernel: numerical scale+add, cat/bin LN + one batched align matmul,
# aligned stores into the padded output slab.
# ---------------------------------------------------------------------------
def _fused_feature_kernel(x_num_ref, catbin_ref, proj_num_ref, proj_bias_ref,
                          w_ref, bw_ref, out_ref):
    f32 = jnp.float32
    tb, l_pad, d = catbin_ref.shape
    n_num_pad = proj_num_ref.shape[0]

    # ---- numerical features: pure VPU scale + add (projection hoisted) -----
    xv = x_num_ref[...].astype(f32)                               # (tb, n_num_pad, 1)
    num_feat = xv * proj_num_ref[...][None] + proj_bias_ref[...][None]
    out_ref[:, :n_num_pad, :] = num_feat.astype(out_ref.dtype)    # aligned block

    # ---- cat + bin rows: f32 LN statistics, affine folded into W/bias ------
    cb = catbin_ref[...].astype(f32)                              # (tb, l_pad, d)
    mu = jnp.mean(cb, axis=-1, keepdims=True)
    var = jnp.mean(jnp.square(cb - mu), axis=-1, keepdims=True)
    x_hat = (cb - mu) * lax.rsqrt(var + LN_EPS)

    # l_pad % 8 == 0 -> tile-aligned (free) reshape; one batched MXU matmul.
    x_rows = x_hat.reshape(tb * l_pad, d).astype(w_ref.dtype)
    dn = (((1,), (0,)), ((), ()))                                 # (M,K) x (K,N)
    feat = lax.dot_general(x_rows, w_ref[...], dn,
                           preferred_element_type=f32) + bw_ref[...]
    out_ref[:, n_num_pad:, :] = feat.reshape(tb, l_pad, d).astype(out_ref.dtype)


def _choose_tile_bs(bs, l_pad, per_batch_bytes, *, target_catbin_rows=2048,
                    vmem_tile_budget=14 << 20):
    """Whole batch if small; otherwise a multiple of 8 batches sized so that
    (a) each grid step streams ~2K cat/bin rows and (b) a double-buffered step
    stays inside a cross-generation VMEM budget (v7x has only 64 MiB)."""
    if bs <= 8:
        return bs
    by_rows = max(8, (max(1, target_catbin_rows // max(l_pad, 1)) // 8) * 8)
    by_vmem = max(8, ((vmem_tile_budget // max(per_batch_bytes, 1)) // 8) * 8)
    return int(min(bs, by_rows, by_vmem))


# ---------------------------------------------------------------------------
# Full TransTabFeatureProcessor forward
# ---------------------------------------------------------------------------
def transtab_feature_processor_forward(
    params,
    x_num, num_col_input_ids, num_att_mask,
    x_cat_input_ids, cat_att_mask,
    x_bin_input_ids, bin_att_mask,
    *, use_bf16=True, out_dtype=jnp.float32, tile_bs_override=None,
):
    emb_table = params["emb_table"]
    D = emb_table.shape[-1]
    gamma = params["ln_gamma"].astype(jnp.float32).reshape(D)
    beta = params["ln_beta"].astype(jnp.float32).reshape(D)
    num_bias = params["num_bias"].astype(jnp.float32).reshape(1, D)
    w = params["w_align"].astype(jnp.float32)                     # (out, in)

    bs, n_num = x_num.shape
    Lc = x_cat_input_ids.shape[1]
    Lb = x_bin_input_ids.shape[1]
    # TODO(synk): Lb == 0 fallback (PyTorch inserts a single pad binary token)
    # and the optional (None) input branches are not handled.
    n_catbin = Lc + Lb

    io_dtype = jnp.bfloat16 if use_bf16 else jnp.float32
    mxu_dtype = jnp.bfloat16 if use_bf16 else jnp.float32

    # ---- batch-invariant numerical-column branch: hoisted to XLA (tiny) ----
    # Precondition (same as PyTorch): every numerical column has >=1 unmasked
    # token, otherwise the masked mean is NaN.
    nc = jnp.take(emb_table.astype(jnp.float32), num_col_input_ids, axis=0)   # (n_num,Ln,D)
    mu = nc.mean(-1, keepdims=True)
    var = ((nc - mu) ** 2).mean(-1, keepdims=True)
    nc_ln = (nc - mu) * lax.rsqrt(var + LN_EPS) * gamma + beta
    m = num_att_mask.astype(jnp.float32)[..., None]
    num_col_emb = (nc_ln * m).sum(1) / m.sum(1)                               # (n_num, D)
    proj_num = num_col_emb @ w.T                                              # (n_num, D)
    proj_bias = (num_bias @ w.T).astype(jnp.float32)                          # (1, D)

    # ---- LN affine folded into the align weight for the cat/bin path -------
    w_eff = (w.T * gamma[:, None]).astype(mxu_dtype)                          # (D_in, D_out)
    b_eff = (beta @ w.T).reshape(1, D).astype(jnp.float32)                    # (1, D)

    # ---- pad rows so every in-kernel store / reshape is sublane-aligned ----
    n_num_pad = (-(-n_num // 8)) * 8
    pad_cb = (-n_catbin) % 8
    l_pad = n_catbin + pad_cb

    proj_num_pad = jnp.zeros((n_num_pad, D), jnp.float32).at[:n_num].set(proj_num)
    x_num_pad = jnp.zeros((bs, n_num_pad, 1), jnp.float32).at[:, :n_num, 0].set(
        x_num.astype(jnp.float32))

    catbin_ids = jnp.concatenate(
        [x_cat_input_ids, x_bin_input_ids,
         jnp.zeros((bs, pad_cb), x_cat_input_ids.dtype)], axis=1)             # (bs, l_pad)
    # bf16 gather halves the dominant HBM stream (gather write + kernel read).
    catbin_raw = jnp.take(emb_table.astype(io_dtype), catbin_ids, axis=0)     # (bs,l_pad,D)
    # TODO(synk): on v5e/v6e (128 MiB VMEM) the gather could move in-kernel with
    # emb_table resident in VMEM (PrefetchScalarGridSpec ids), removing this
    # HBM round trip entirely; kept as XLA gather for v7x's 64 MiB budget.

    io_bytes = jnp.dtype(io_dtype).itemsize
    out_bytes = jnp.dtype(out_dtype).itemsize
    per_batch_bytes = (l_pad * D * io_bytes
                       + (n_num_pad + l_pad) * D * out_bytes
                       + n_num_pad * 4)
    tile_bs = tile_bs_override or _choose_tile_bs(bs, l_pad, per_batch_bytes)
    grid = (pl.cdiv(bs, tile_bs),)

    const_bytes = (n_num_pad * D + 3 * D + D * D) * 4
    need = 2 * tile_bs * per_batch_bytes + 2 * const_bytes
    vmem_limit = int(min(max(need * 3 // 2 + (2 << 20), 16 << 20), 48 << 20))

    T_pad = n_num_pad + l_pad
    slab = pl.pallas_call(
        _fused_feature_kernel,
        grid=grid,
        in_specs=[
            pl.BlockSpec((tile_bs, n_num_pad, 1), lambda b: (b, 0, 0)),  # x_num (padded)
            pl.BlockSpec((tile_bs, l_pad, D), lambda b: (b, 0, 0)),      # cat+bin word emb
            pl.BlockSpec((n_num_pad, D), lambda b: (0, 0)),              # proj_num (hoisted)
            pl.BlockSpec((1, D), lambda b: (0, 0)),                      # proj_bias (hoisted)
            pl.BlockSpec((D, D), lambda b: (0, 0)),                      # gamma-folded W.T
            pl.BlockSpec((1, D), lambda b: (0, 0)),                      # beta @ W.T
        ],
        out_specs=pl.BlockSpec((tile_bs, T_pad, D), lambda b: (b, 0, 0)),
        out_shape=jax.ShapeDtypeStruct((bs, T_pad, D), out_dtype),
        compiler_params=pltpu.CompilerParams(
            dimension_semantics=("parallel",),
            vmem_limit_bytes=vmem_limit),
    )(x_num_pad, catbin_raw, proj_num_pad, proj_bias, w_eff, b_eff)

    # Slice the valid rows out of the aligned padded slab (review-sanctioned).
    embedding = jnp.concatenate(
        [slab[:, :n_num], slab[:, n_num_pad:n_num_pad + n_catbin]], axis=1)

    attention_mask = jnp.concatenate(
        [jnp.ones((bs, n_num), jnp.float32),
         cat_att_mask.astype(jnp.float32),
         bin_att_mask.astype(jnp.float32)], axis=1)
    return {"embedding": embedding, "attention_mask": attention_mask}


# ---------------------------------------------------------------------------
# Pure-JAX f32 reference for verification (mirrors the PyTorch module)
# ---------------------------------------------------------------------------
def reference_forward(params, x_num, num_ids, num_mask, cat_ids, cat_mask,
                      bin_ids, bin_mask):
    emb_table = params["emb_table"]
    gamma, beta = params["ln_gamma"], params["ln_beta"]
    num_bias, w = params["num_bias"], params["w_align"]

    def ln(x):
        mu = x.mean(-1, keepdims=True)
        var = ((x - mu) ** 2).mean(-1, keepdims=True)
        return (x - mu) / jnp.sqrt(var + LN_EPS) * gamma + beta

    num_col = ln(jnp.take(emb_table, num_ids, axis=0))
    m = num_mask.astype(jnp.float32)
    num_col = (num_col * m[..., None]).sum(1) / m.sum(1, keepdims=True)
    num_feat = (num_col[None] * x_num[..., None] + num_bias.reshape(1, 1, -1)) @ w.T
    cat_feat = ln(jnp.take(emb_table, cat_ids, axis=0)) @ w.T
    bin_feat = ln(jnp.take(emb_table, bin_ids, axis=0)) @ w.T
    bs, n_num = x_num.shape
    emb = jnp.concatenate([num_feat, cat_feat, bin_feat], axis=1)
    attn = jnp.concatenate([jnp.ones((bs, n_num)), cat_mask.astype(jnp.float32),
                            bin_mask.astype(jnp.float32)], axis=1)
    return {"embedding": emb, "attention_mask": attn}


# ---------------------------------------------------------------------------
if __name__ == "__main__":
    key = jax.random.PRNGKey(0)
    # TransTab default hidden_dim=128 -> lane-aligned last dim on TPU.
    vocab_size, hidden_dim = 100, 128
    n_num, seq_num, seq_cat, seq_bin = 3, 4, 5, 2

    k = iter(jax.random.split(key, 16))

    # --- deterministic parameter init (mirrors module __init__ shapes) ---
    # Non-trivial gamma/beta so the LN-affine fold is actually exercised.
    params = {
        "emb_table": jax.random.normal(next(k), (vocab_size, hidden_dim), jnp.float32)
                     * math.sqrt(2.0 / hidden_dim),
        "ln_gamma": 1.0 + 0.1 * jax.random.normal(next(k), (hidden_dim,), jnp.float32),
        "ln_beta": 0.1 * jax.random.normal(next(k), (hidden_dim,), jnp.float32),
        "num_bias": jax.random.uniform(next(k), (1, 1, hidden_dim), jnp.float32,
                                       -1.0 / math.sqrt(hidden_dim),
                                       1.0 / math.sqrt(hidden_dim)),
        "w_align": jax.random.uniform(next(k), (hidden_dim, hidden_dim), jnp.float32,
                                      -1.0 / math.sqrt(hidden_dim),
                                      1.0 / math.sqrt(hidden_dim)),
    }

    def make_inputs(bs, kk):
        x_num = jax.random.normal(next(kk), (bs, n_num), jnp.float32)
        num_ids = jax.random.randint(next(kk), (n_num, seq_num), 1, vocab_size)
        num_mask = jnp.ones((n_num, seq_num), jnp.int32).at[:, -1].set(0)
        cat_ids = jax.random.randint(next(kk), (bs, seq_cat), 1, vocab_size)
        cat_mask = jnp.ones((bs, seq_cat), jnp.int32).at[:, -1].set(0)
        bin_ids = jax.random.randint(next(kk), (bs, seq_bin), 1, vocab_size)
        bin_mask = jnp.ones((bs, seq_bin), jnp.int32)
        return (x_num, num_ids, num_mask, cat_ids, cat_mask, bin_ids, bin_mask)

    T = n_num + seq_cat + seq_bin

    # --- 1) strict f32 mode (semantics check vs. the f32 reference) ---------
    bs1 = 4
    args1 = make_inputs(bs1, k)
    out32 = transtab_feature_processor_forward(params, *args1, use_bf16=False)
    jax.block_until_ready(out32)
    ref1 = reference_forward(params, *args1)
    assert out32["embedding"].shape == (bs1, T, hidden_dim)
    assert out32["attention_mask"].shape == (bs1, T)
    assert jnp.allclose(out32["embedding"], ref1["embedding"], rtol=1e-3, atol=1e-3)
    assert jnp.allclose(out32["attention_mask"], ref1["attention_mask"])

    # --- 2) default bf16-I/O fast path (perf mode, looser tolerance) --------
    out16 = transtab_feature_processor_forward(params, *args1, use_bf16=True)
    jax.block_until_ready(out16)
    assert jnp.allclose(out16["embedding"], ref1["embedding"], rtol=5e-2, atol=5e-2)

    # --- 3) multi-tile grid with a partial last tile (bs not % tile_bs) -----
    bs2 = 10
    args2 = make_inputs(bs2, k)
    out_pt = transtab_feature_processor_forward(params, *args2, use_bf16=False,
                                                tile_bs_override=4)
    jax.block_until_ready(out_pt)
    ref2 = reference_forward(params, *args2)
    assert out_pt["embedding"].shape == (bs2, T, hidden_dim)
    assert jnp.allclose(out_pt["embedding"], ref2["embedding"], rtol=1e-3, atol=1e-3)
    assert jnp.allclose(out_pt["attention_mask"], ref2["attention_mask"])

    print("KERNEL_OK")
</pallas_src>

<mosaic_0001>
module attributes {stable_mosaic.version = 11 : i64} {
  func.func @_fused_feature_kernel(%arg0: i32, %arg1: memref<4x8x1xf32, #tpu.memory_space<vmem>>, %arg2: memref<4x8x128xf32, #tpu.memory_space<vmem>>, %arg3: memref<8x128xf32, #tpu.memory_space<vmem>>, %arg4: memref<1x128xf32, #tpu.memory_space<vmem>>, %arg5: memref<128x128xf32, #tpu.memory_space<vmem>>, %arg6: memref<1x128xf32, #tpu.memory_space<vmem>>, %arg7: memref<4x16x128xf32, #tpu.memory_space<vmem>>) attributes {dimension_semantics = [#tpu.dimension_semantics<parallel>], iteration_bounds = array<i64: 1>, scalar_prefetch = 0 : i64, scratch_operands = 0 : i64, tpu.core_type = #tpu.core_type<tc>, window_params = [{transform_indices = @transform_0, window_bounds = array<i64: 4, 8, 1>}, {transform_indices = @transform_1, window_bounds = array<i64: 4, 8, 128>}, {pipeline_mode = #tpu.pipeline_mode<synchronous>, transform_indices = @transform_2, window_bounds = array<i64: 8, 128>}, {pipeline_mode = #tpu.pipeline_mode<synchronous>, transform_indices = @transform_3, window_bounds = array<i64: 1, 128>}, {pipeline_mode = #tpu.pipeline_mode<synchronous>, transform_indices = @transform_4, window_bounds = array<i64: 128, 128>}, {pipeline_mode = #tpu.pipeline_mode<synchronous>, transform_indices = @transform_5, window_bounds = array<i64: 1, 128>}, {transform_indices = @transform_6, window_bounds = array<i64: 4, 16, 128>}]} {
    %c0 = arith.constant 0 : index
    %c0_0 = arith.constant 0 : index
    %c0_1 = arith.constant 0 : index
    %0 = vector.load %arg1[%c0, %c0_0, %c0_1] : memref<4x8x1xf32, #tpu.memory_space<vmem>>, vector<4x8x1xf32>
    %c0_2 = arith.constant 0 : index
    %c0_3 = arith.constant 0 : index
    %1 = vector.load %arg3[%c0_2, %c0_3] : memref<8x128xf32, #tpu.memory_space<vmem>>, vector<8x128xf32>
    %2 = vector.shape_cast %1 : vector<8x128xf32> to vector<1x8x128xf32>
    %3 = vector.broadcast %0 : vector<4x8x1xf32> to vector<4x8x128xf32>
    %4 = vector.broadcast %2 : vector<1x8x128xf32> to vector<4x8x128xf32>
    %5 = arith.mulf %3, %4 : vector<4x8x128xf32>
    %c0_4 = arith.constant 0 : index
    %c0_5 = arith.constant 0 : index
    %6 = vector.load %arg4[%c0_4, %c0_5] : memref<1x128xf32, #tpu.memory_space<vmem>>, vector<1x128xf32>
    %7 = vector.shape_cast %6 : vector<1x128xf32> to vector<1x1x128xf32>
    %8 = vector.broadcast %7 : vector<1x1x128xf32> to vector<4x8x128xf32>
    %9 = arith.addf %5, %8 : vector<4x8x128xf32>
    %c0_6 = arith.constant 0 : index
    %c0_7 = arith.constant 0 : index
    %c0_8 = arith.constant 0 : index
    %10 = vector.load %arg7[%c0_6, %c0_7, %c0_8] : memref<4x16x128xf32, #tpu.memory_space<vmem>>, vector<4x8x128xf32>
    tpu.vector_store %arg7[%c0_6, %c0_7, %c0_8], %9 {strides = array<i32>} : memref<4x16x128xf32, #tpu.memory_space<vmem>>, vector<4x8x128xf32>,
    %c0_9 = arith.constant 0 : index
    %c0_10 = arith.constant 0 : index
    %c0_11 = arith.constant 0 : index
    %11 = vector.load %arg2[%c0_9, %c0_10, %c0_11] : memref<4x8x128xf32, #tpu.memory_space<vmem>>, vector<4x8x128xf32>
    %cst = arith.constant dense<0.000000e+00> : vector<4x8xf32>
    %12 = vector.multi_reduction <add>, %11, %cst [2] : vector<4x8x128xf32> to vector<4x8xf32>
    %13 = vector.shape_cast %12 : vector<4x8xf32> to vector<4x8x1xf32>
    %cst_12 = arith.constant 1.280000e+02 : f32
    %14 = vector.broadcast %cst_12 : f32 to vector<4x8x1xf32>
    %15 = arith.divf %13, %14 : vector<4x8x1xf32>
    %16 = vector.broadcast %15 : vector<4x8x1xf32> to vector<4x8x128xf32>
    %17 = arith.subf %11, %16 : vector<4x8x128xf32>
    %18 = arith.mulf %17, %17 : vector<4x8x128xf32>
    %cst_13 = arith.constant dense<0.000000e+00> : vector<4x8xf32>
    %19 = vector.multi_reduction <add>, %18, %cst_13 [2] : vector<4x8x128xf32> to vector<4x8xf32>
    %20 = vector.shape_cast %19 : vector<4x8xf32> to vector<4x8x1xf32>
    %cst_14 = arith.constant 1.280000e+02 : f32
    %21 = vector.broadcast %cst_14 : f32 to vector<4x8x1xf32>
    %22 = arith.divf %20, %21 : vector<4x8x1xf32>
    %23 = vector.broadcast %15 : vector<4x8x1xf32> to vector<4x8x128xf32>
    %24 = arith.subf %11, %23 : vector<4x8x128xf32>
    %cst_15 = arith.constant 9.99999974E-6 : f32
    %25 = vector.broadcast %cst_15 : f32 to vector<4x8x1xf32>
    %26 = arith.addf %22, %25 : vector<4x8x1xf32>
    %27 = math.rsqrt %26 : vector<4x8x1xf32>
    %28 = vector.broadcast %27 : vector<4x8x1xf32> to vector<4x8x128xf32>
    %29 = arith.mulf %24, %28 : vector<4x8x128xf32>
    %30 = vector.shape_cast %29 : vector<4x8x128xf32> to vector<32x128xf32>
    %c0_16 = arith.constant 0 : index
    %c0_17 = arith.constant 0 : index
    %31 = vector.load %arg5[%c0_16, %c0_17] : memref<128x128xf32, #tpu.memory_space<vmem>>, vector<128x128xf32>
    %cst_18 = arith.constant dense<0.000000e+00> : vector<32x128xf32>
    %32 = tpu.matmul %30, %31, %cst_18 {dimension_numbers = #tpu.dot_dimension_numbers<[1], [0], [0], [1], [0, 0, 1, 1], [], []>} : vector<32x128xf32>, vector<128x128xf32>, vector<32x128xf32> -> vector<32x128xf32>
    %c0_19 = arith.constant 0 : index
    %c0_20 = arith.constant 0 : index
    %33 = vector.load %arg6[%c0_19, %c0_20] : memref<1x128xf32, #tpu.memory_space<vmem>>, vector<1x128xf32>
    %34 = vector.broadcast %33 : vector<1x128xf32> to vector<32x128xf32>
    %35 = arith.addf %32, %34 : vector<32x128xf32>
    %36 = vector.shape_cast %35 : vector<32x128xf32> to vector<4x8x128xf32>
    %c0_21 = arith.constant 0 : index
    %c8 = arith.constant 8 : index
    %c0_22 = arith.constant 0 : index
    %37 = vector.load %arg7[%c0_21, %c8, %c0_22] : memref<4x16x128xf32, #tpu.memory_space<vmem>>, vector<4x8x128xf32>
    tpu.vector_store %arg7[%c0_21, %c8, %c0_22], %36 {strides = array<i32>} : memref<4x16x128xf32, #tpu.memory_space<vmem>>, vector<4x8x128xf32>,
    return
  }
  func.func @transform_0(%arg0: i32) -> (i32, i32, i32) {
    %c0_i32 = arith.constant 0 : i32
    %c0_i32_0 = arith.constant 0 : i32
    %c0_i32_1 = arith.constant 0 : i32
    return %arg0, %c0_i32, %c0_i32_0 : i32, i32, i32
  }
  func.func @transform_1(%arg0: i32) -> (i32, i32, i32) {
    %c0_i32 = arith.constant 0 : i32
    %c0_i32_0 = arith.constant 0 : i32
    %c0_i32_1 = arith.constant 0 : i32
    return %arg0, %c0_i32, %c0_i32_0 : i32, i32, i32
  }
  func.func @transform_2(%arg0: i32) -> (i32, i32) {
    %c0_i32 = arith.constant 0 : i32
    %c0_i32_0 = arith.constant 0 : i32
    %c0_i32_1 = arith.constant 0 : i32
    return %c0_i32, %c0_i32_0 : i32, i32
  }
  func.func @transform_3(%arg0: i32) -> (i32, i32) {
    %c0_i32 = arith.constant 0 : i32
    %c0_i32_0 = arith.constant 0 : i32
    %c0_i32_1 = arith.constant 0 : i32
    return %c0_i32, %c0_i32_0 : i32, i32
  }
  func.func @transform_4(%arg0: i32) -> (i32, i32) {
    %c0_i32 = arith.constant 0 : i32
    %c0_i32_0 = arith.constant 0 : i32
    %c0_i32_1 = arith.constant 0 : i32
    return %c0_i32, %c0_i32_0 : i32, i32
  }
  func.func @transform_5(%arg0: i32) -> (i32, i32) {
    %c0_i32 = arith.constant 0 : i32
    %c0_i32_0 = arith.constant 0 : i32
    %c0_i32_1 = arith.constant 0 : i32
    return %c0_i32, %c0_i32_0 : i32, i32
  }
  func.func @transform_6(%arg0: i32) -> (i32, i32, i32) {
    %c0_i32 = arith.constant 0 : i32
    %c0_i32_0 = arith.constant 0 : i32
    %c0_i32_1 = arith.constant 0 : i32
    return %arg0, %c0_i32, %c0_i32_0 : i32, i32, i32
  }
}

</mosaic_0001>

<llo_original>
// kernel: tpu_custom_call.1
$region0: #{tpu_custom_call.1}
  #allocation0 [shape = 'u32[]', space=smem, size = 0x4, offset = 0x4, fixed_abs, tag = 'smem constant byte address 0x4 - core index']
  #allocation1 [shape = 'u32[72,128]{1,0:T(1,128)}', space=vmem, size = 0x9000, scoped, tag = 'internal scratch']
  %s0 = inlined_call_operand.vmem [shape: f32[4,8,1], index: 0, kind: input, shape index: {}]
  %s1 = inlined_call_operand.vmem [shape: f32[4,8,128], index: 1, kind: input, shape index: {}]
  %s2 = inlined_call_operand.hbm [shape: f32[8,128], index: 2, kind: input, shape index: {}]
  %s3 = inlined_call_operand.vmem [shape: f32[1,128], index: 3, kind: input, shape index: {}]
  %s4 = inlined_call_operand.hbm [shape: f32[128,128], index: 4, kind: input, shape index: {}]
  %s5 = inlined_call_operand.vmem [shape: f32[1,128], index: 5, kind: input, shape index: {}]
  %s6 = inlined_call_operand.hbm [shape: f32[4,16,128], index: 6, kind: output, shape index: {}]
  %s7 = sld [smem:[#allocation0]]
  $region42: #{tpu_custom_call.1} parent=0
    _
  %s9 = ssub.s32 1, %s7
  %s10 = scalar_select 0, %s9, %s7
  $region1: #{tpu_custom_call.1} parent=0
    #allocation2 [shape = 'u8[4096]{0}', space=vmem, size = 0x1000, scoped, tag = 'input window, operand 2, single buffered']
    #allocation3 [shape = 's32[1]{0}', space=sflag, size = 0x4, scoped, tag = 'scoped memory for tpu_custom_call.1']
    #allocation4 [shape = 's32[1]{0}', space=sflag, size = 0x4, scoped, tag = 'scoped memory for tpu_custom_call.1']
    #allocation5 [shape = 'u8[65536]{0}', space=vmem, size = 0x10000, scoped, tag = 'input window, operand 4, single buffered']
    #allocation6 [shape = 's32[1]{0}', space=sflag, size = 0x4, scoped, tag = 'scoped memory for tpu_custom_call.1']
    #allocation7 [shape = 'u8[32768]{0}', space=vmem, size = 0x8000, scoped, tag = 'output window, operand 0, single buffered']
    %11 = vsyncpa [#allocation3], 0
    %12 = vsyncpa [#allocation6], 0
    %13 = vsyncpa [#allocation4], 0
    // Predicated region
    $region2: #{tpu_custom_call.1} parent=1 // pred_check
      _
    $region3: #{tpu_custom_call.1} parent=1 // pred_check_branch
      %15 = sbr.rel (0) target = $region5
    $region4: #{tpu_custom_call.1} parent=1 // pred_region
      _
    $region5: #{tpu_custom_call.1} parent=1 // pred_fallthru
      _
    // Predicated region
    $region6: #{tpu_custom_call.1} parent=1 // pred_check
      _
    $region7: #{tpu_custom_call.1} parent=1 // pred_check_branch
      %17 = sbr.rel (0) target = $region9
    $region8: #{tpu_custom_call.1} parent=1 // pred_region
      _
    $region9: #{tpu_custom_call.1} parent=1 // pred_fallthru
      _
    // Predicated region
    $region10: #{tpu_custom_call.1} parent=1 // pred_check
      _
    $region11: #{tpu_custom_call.1} parent=1 // pred_check_branch
      %19 = sbr.rel (0) target = $region13
    $region12: #{tpu_custom_call.1} parent=1 // pred_region
      %21 = vsyncadd [#allocation3], 0
      %s23 = sshll.u32 %s2, 4
      %s24 = int_to_ptr.hbm [resolvable:$true] %s23
      %s25 = sshll.u32 [#allocation2], 4
      %s26 = int_to_ptr.vmem [resolvable:$true] %s25
      %28 = dma.hbm_to_vmem [thread:$0]  %s24, 128, %s26, [#allocation3]
    $region13: #{tpu_custom_call.1} parent=1 // pred_fallthru
      _
    // Predicated region
    $region14: #{tpu_custom_call.1} parent=1 // pred_check
      _
    $region15: #{tpu_custom_call.1} parent=1 // pred_check_branch
      %30 = sbr.rel (0) target = $region17
    $region16: #{tpu_custom_call.1} parent=1 // pred_region
      _
    $region17: #{tpu_custom_call.1} parent=1 // pred_fallthru
      _
    // Predicated region
    $region18: #{tpu_custom_call.1} parent=1 // pred_check
      _
    $region19: #{tpu_custom_call.1} parent=1 // pred_check_branch
      %32 = sbr.rel (0) target = $region21
    $region20: #{tpu_custom_call.1} parent=1 // pred_region
      %34 = vsyncadd [#allocation6], 0
      %s35 = sshll.u32 %s4, 4
      %s36 = int_to_ptr.hbm [resolvable:$true] %s35
      %s37 = sshll.u32 [#allocation5], 4
      %s38 = int_to_ptr.vmem [resolvable:$true] %s37
      %43 = dma.hbm_to_vmem [thread:$0]  %s36, 2048, %s38, [#allocation6], 128, 128, 8
    $region21: #{tpu_custom_call.1} parent=1 // pred_fallthru
      _
    // Predicated region
    $region22: #{tpu_custom_call.1} parent=1 // pred_check
      _
    $region23: #{tpu_custom_call.1} parent=1 // pred_check_branch
      %45 = sbr.rel (0) target = $region25
    $region24: #{tpu_custom_call.1} parent=1 // pred_region
      _
    $region25: #{tpu_custom_call.1} parent=1 // pred_fallthru
      _
    // Predicated region
    $region26: #{tpu_custom_call.1} parent=1 // pred_check
      _
    $region27: #{tpu_custom_call.1} parent=1 // pred_check_branch
      %47 = sbr.rel (0) target = $region29
    $region28: #{tpu_custom_call.1} parent=1 // pred_region
      %49 = dma.done [#allocation3], 128
    $region29: #{tpu_custom_call.1} parent=1 // pred_fallthru
      _
    // Predicated region
    $region30: #{tpu_custom_call.1} parent=1 // pred_check
      _
    $region31: #{tpu_custom_call.1} parent=1 // pred_check_branch
      %51 = sbr.rel (0) target = $region33
    $region32: #{tpu_custom_call.1} parent=1 // pred_region
      %53 = dma.done [#allocation6], 2048
    $region33: #{tpu_custom_call.1} parent=1 // pred_fallthru
      _
    %v54 = vld [vmem:[%s0] sm:$0xff]
    %v55 = vld [vmem:[%s0 + $0x8] sm:$0xff]
    %v56 = vld [vmem:[%s0 + $0x10] sm:$0xff]
    %v57 = vld [vmem:[%s0 + $0x18] sm:$0xff]
    %v58 = vld [vmem:[#allocation2] sm:$0xff]
    %60 = vset.pattern.permute.xlu0 0
    %61 = vperm.xlu0 %60, %v54
    %v62 = vpop.permute.xlu0 %61
    %65 = vset.pattern.permute.xlu0 0
    %66 = vperm.xlu0 %65, %v55
    %v67 = vpop.permute.xlu0 %66
    %70 = vset.pattern.permute.xlu0 0
    %71 = vperm.xlu0 %70, %v56
    %v72 = vpop.permute.xlu0 %71
    %75 = vset.pattern.permute.xlu0 0
    %76 = vperm.xlu0 %75, %v57
    %v77 = vpop.permute.xlu0 %76
    %v79 = vmul.f32 %v62, %v58
    %v80 = vmul.f32 %v67, %v58
    %v81 = vmul.f32 %v72, %v58
    %v82 = vmul.f32 %v77, %v58
    %v83 = vld [vmem:[%s3] sm:$0x1]
    %v85 = vperm.slane %v83, 0
    %v87 = vadd.f32 %v79, %v85
    %v88 = vadd.f32 %v80, %v85
    %v89 = vadd.f32 %v81, %v85
    %v90 = vadd.f32 %v82, %v85
    %91 = vst [vmem:[#allocation7] sm:$0xff] %v87
    %92 = vst [vmem:[#allocation7 + $0x10] sm:$0xff] %v88
    %93 = vst [vmem:[#allocation7 + $0x20] sm:$0xff] %v89
    %94 = vst [vmem:[#allocation7 + $0x30] sm:$0xff] %v90
    %v95 = vld [vmem:[%s1] sm:$0xff]
    %v96 = vld [vmem:[%s1 + $0x8] sm:$0xff]
    %v97 = vld [vmem:[%s1 + $0x10] sm:$0xff]
    %v98 = vld [vmem:[%s1 + $0x18] sm:$0xff]
    %99 = vadd.xlane.f32.xlu0 %v95
    %v100 = vpop.xlane.xlu0 %99
    %101 = vadd.xlane.f32.xlu0 %v96
    %v102 = vpop.xlane.xlu0 %101
    %103 = vadd.xlane.f32.xlu0 %v97
    %v104 = vpop.xlane.xlu0 %103
    %105 = vadd.xlane.f32.xlu0 %v98
    %v106 = vpop.xlane.xlu0 %105
    %v107 = vrcp.pop 128.0
    %v108 = vmul.f32 128.0, %v107
    %v109 = vsub.f32 1.0, %v108
    %v110 = vmul.f32 %v107, %v109
    %v111 = vadd.f32 %v107, %v110
    %vm112 = vweird.f32 %v107
    %v113 = vsel %vm112, %v107, %v111
    %v114 = vmul.f32 %v100, %v113
    %v115 = vmul.f32 %v102, %v113
    %v116 = vmul.f32 %v104, %v113
    %v117 = vmul.f32 %v106, %v113
    %v118 = vsub.f32 %v95, %v114
    %v119 = vsub.f32 %v96, %v115
    %v120 = vsub.f32 %v97, %v116
    %v121 = vsub.f32 %v98, %v117
    %v122 = vmul.f32 %v118, %v118
    %v123 = vmul.f32 %v119, %v119
    %v124 = vmul.f32 %v120, %v120
    %v125 = vmul.f32 %v121, %v121
    %126 = vadd.xlane.f32.xlu0 %v122
    %v127 = vpop.xlane.xlu0 %126
    %128 = vadd.xlane.f32.xlu0 %v123
    %v129 = vpop.xlane.xlu0 %128
    %130 = vadd.xlane.f32.xlu0 %v124
    %v131 = vpop.xlane.xlu0 %130
    %132 = vadd.xlane.f32.xlu0 %v125
    %v133 = vpop.xlane.xlu0 %132
    %v134 = vmul.f32 %v127, %v113
    %v135 = vmul.f32 %v129, %v113
    %v136 = vmul.f32 %v131, %v113
    %v137 = vmul.f32 %v133, %v113
    %v138 = vadd.f32 %v134, 1e-05
    %v139 = vadd.f32 %v135, 1e-05
    %v140 = vadd.f32 %v136, 1e-05
    %v141 = vadd.f32 %v137, 1e-05
    %v142 = vrsqrt.pop %v138
    %v143 = vmul.f32 %v142, %v138
    %v144 = vmul.f32 %v143, %v142
    %v145 = vmul.f32 0.5, %v144
    %v146 = vsub.f32 1.5, %v145
    %v147 = vmul.f32 %v142, %v146
    %vm148 = vweird.f32 %v138
    %vm149 = vweird.f32 %v142
    %vm150 = vmor %vm148, %vm149
    %v151 = vsel %vm150, %v142, %v147
    %v152 = vrsqrt.pop %v139
    %v153 = vmul.f32 %v152, %v139
    %v154 = vmul.f32 %v153, %v152
    %v155 = vmul.f32 0.5, %v154
    %v156 = vsub.f32 1.5, %v155
    %v157 = vmul.f32 %v152, %v156
    %vm158 = vweird.f32 %v139
    %vm159 = vweird.f32 %v152
    %vm160 = vmor %vm158, %vm159
    %v161 = vsel %vm160, %v152, %v157
    %v162 = vrsqrt.pop %v140
    %v163 = vmul.f32 %v162, %v140
    %v164 = vmul.f32 %v163, %v162
    %v165 = vmul.f32 0.5, %v164
    %v166 = vsub.f32 1.5, %v165
    %v167 = vmul.f32 %v162, %v166
    %vm168 = vweird.f32 %v140
    %vm169 = vweird.f32 %v162
    %vm170 = vmor %vm168, %vm169
    %v171 = vsel %vm170, %v162, %v167
    %v172 = vrsqrt.pop %v141
    %v173 = vmul.f32 %v172, %v141
    %v174 = vmul.f32 %v173, %v172
    %v175 = vmul.f32 0.5, %v174
    %v176 = vsub.f32 1.5, %v175
    %v177 = vmul.f32 %v172, %v176
    %vm178 = vweird.f32 %v141
    %vm179 = vweird.f32 %v172
    %vm180 = vmor %vm178, %vm179
    %v181 = vsel %vm180, %v172, %v177
    %v182 = vmul.f32 %v118, %v151
    %v183 = vmul.f32 %v119, %v161
    %v184 = vmul.f32 %v120, %v171
    %v185 = vmul.f32 %v121, %v181
    %v186 = vld [vmem:[#allocation5] sm:$0xff]
    %v187 = vld [vmem:[#allocation5 + $0x8] sm:$0xff]
    %v188 = vld [vmem:[#allocation5 + $0x10] sm:$0xff]
    %v189 = vld [vmem:[#allocation5 + $0x18] sm:$0xff]
    %v190 = vld [vmem:[#allocation5 + $0x20] sm:$0xff]
    %v191 = vld [vmem:[#allocation5 + $0x28] sm:$0xff]
    %v192 = vld [vmem:[#allocation5 + $0x30] sm:$0xff]
    %v193 = vld [vmem:[#allocation5 + $0x38] sm:$0xff]
    %v194 = vld [vmem:[#allocation5 + $0x40] sm:$0xff]
    %v195 = vld [vmem:[#allocation5 + $0x48] sm:$0xff]
    %v196 = vld [vmem:[#allocation5 + $0x50] sm:$0xff]
    %v197 = vld [vmem:[#allocation5 + $0x58] sm:$0xff]
    %v198 = vld [vmem:[#allocation5 + $0x60] sm:$0xff]
    %v199 = vld [vmem:[#allocation5 + $0x68] sm:$0xff]
    %v200 = vld [vmem:[#allocation5 + $0x70] sm:$0xff]
    %v201 = vld [vmem:[#allocation5 + $0x78] sm:$0xff]
    %v202 = vld [vmem:[%s5] sm:$0x1]
    %v204 = vperm.slane %v202, 0
    %206 = vmatpush.msra.mxu0 %v201
    %207 = vmatpush.msra.mxu0 %v200
    %208 = vmatpush.msra.mxu0 %v199
    %209 = vmatpush.msra.mxu0 %v198
    %210 = vmatpush.msra.mxu0 %v197
    %211 = vmatpush.msra.mxu0 %v196
    %212 = vmatpush.msra.mxu0 %v195
    %213 = vmatpush.msra.mxu0 %v194
    %214 = vmatpush.msra.mxu0 %v193
    %215 = vmatpush.msra.mxu0 %v192
    %216 = vmatpush.msra.mxu0 %v191
    %217 = vmatpush.msra.mxu0 %v190
    %218 = vmatpush.msra.mxu0 %v189
    %219 = vmatpush.msra.mxu0 %v188
    %220 = vmatpush.msra.mxu0 %v187
    %221 = vmatpush.msra.mxu0 %v186
    %222 = vmatmul.f32.gmra.mxu0 %v182
    %v223 = vpop.f32.mrf.mxu0
    %v224 = vadd.f32 %v204, %v223
    %225 = vmatmul.f32.gmra.mxu0 %v183
    %v226 = vpop.f32.mrf.mxu0
    %v227 = vadd.f32 %v204, %v226
    %228 = vmatmul.f32.gmra.mxu0 %v184
    %v229 = vpop.f32.mrf.mxu0
    %v230 = vadd.f32 %v204, %v229
    %231 = vmatmul.f32.gmra.mxu0 %v185
    %v232 = vpop.f32.mrf.mxu0
    %v233 = vadd.f32 %v204, %v232
    %234 = vdwg.mxu0
    %235 = vst [vmem:[#allocation7 + $0x8] sm:$0xff] %v224
    %236 = vst [vmem:[#allocation7 + $0x18] sm:$0xff] %v227
    %237 = vst [vmem:[#allocation7 + $0x28] sm:$0xff] %v230
    %238 = vst [vmem:[#allocation7 + $0x38] sm:$0xff] %v233
    // Predicated region
    $region34: #{tpu_custom_call.1} parent=1 // pred_check
      _
    $region35: #{tpu_custom_call.1} parent=1 // pred_check_branch
      %240 = sbr.rel (0) target = $region37
    $region36: #{tpu_custom_call.1} parent=1 // pred_region
      %242 = vsyncadd [#allocation4], 0
      %s243 = sshll.u32 [#allocation7], 4
      %s244 = int_to_ptr.vmem [resolvable:$true] %s243
      %s245 = sshll.u32 %s6, 4
      %s246 = int_to_ptr.hbm [resolvable:$true] %s245
      %251 = dma.vmem_to_hbm [thread:$0]  %s244, 1024, %s246, [#allocation4], 128, 128, 8
    $region37: #{tpu_custom_call.1} parent=1 // pred_fallthru
      _
    // Predicated region
    $region38: #{tpu_custom_call.1} parent=1 // pred_check
      _
    $region39: #{tpu_custom_call.1} parent=1 // pred_check_branch
      %253 = sbr.rel (0) target = $region41
    $region40: #{tpu_custom_call.1} parent=1 // pred_region
      %255 = dma.done [#allocation4], 1024
    $region41: #{tpu_custom_call.1} parent=1 // pred_fallthru
      _
    %256 = vsyncpa [#allocation3], 1
    %257 = vsyncpa [#allocation6], 1
    %258 = vsyncpa [#allocation4], 1

</llo_original>
